<compile_context>
chip_gen: v7x
topology: tpu7x:2x2x1
jax: 0.10.0
libtpu: 0.0.40
codegen_flags: <defaults>
</compile_context>

<pallas_src>
import functools

import jax
import jax.numpy as jnp
from jax.experimental import pallas as pl
from jax.experimental.pallas import tpu as pltpu


def _round_up(x, m):
    return ((x + m - 1) // m) * m


def _tensorcores_per_chip():
    """Best-effort TC count: v7x has 2 TensorCores/chip, v5e/v6e have 1."""
    try:
        kind = (getattr(jax.devices()[0], "device_kind", "") or "").lower()
    except Exception:
        kind = ""
    return 2 if "v7" in kind else 1


# ----------------------------- Pallas kernel ------------------------------ #
def _epinet_kernel(t_ref, p1_ref, p2_ref, o_ref, *, hp):
    """Fused MLP, feature-major (batch in lanes).

    t_ref : (1,  TB)      one scalar time per batch column
    p1_ref: (Hp, Hp + 3)  [ w2^T | b2 | w1 | b1 ]  (column vectors)
    p2_ref: (Op, Hp + 1)  [ w3^T | b3 ]
    o_ref : (Op, TB)
    """
    t = t_ref[...]                              # (1, TB)

    w2 = p1_ref[:, :hp]                         # (Hp, Hp)
    b2 = p1_ref[:, hp:hp + 1]                   # (Hp, 1)
    w1 = p1_ref[:, hp + 1:hp + 2]               # (Hp, 1)
    b1 = p1_ref[:, hp + 2:hp + 3]               # (Hp, 1)
    w3 = p2_ref[:, :hp]                         # (Op, Hp)
    b3 = p2_ref[:, hp:hp + 1]                   # (Op, 1)

    # Layer 1: Linear(1, H) + Tanh.  K=1 matmul == outer product -> VPU FMA.
    h = jnp.tanh(w1 * t + b1)                                        # (Hp, TB)

    # Layer 2: Linear(H, H) + Tanh (tiny MXU matmul, lane-dense RHS).
    h = jnp.tanh(
        jnp.dot(w2, h, preferred_element_type=jnp.float32) + b2)     # (Hp, TB)

    # Output layer: Linear(H, O) + Sigmoid (single-EUP form of sigmoid).
    y = jnp.dot(w3, h, preferred_element_type=jnp.float32) + b3      # (Op, TB)
    o_ref[...] = 0.5 * (jnp.tanh(0.5 * y) + 1.0)


# --------------------- One-time host-side parameter pack ------------------ #
def pack_epinet_params(params):
    """Repack the six (in,out)-layout tensors into two sublane-aligned,
    feature-major slabs.  Do this once per parameter set and reuse."""
    w1, b1, w2, b2, w3, b3 = (params[k] for k in ("w1", "b1", "w2", "b2", "w3", "b3"))
    hidden = w1.shape[1]
    out_size = w3.shape[1]
    hp = _round_up(hidden, 8)
    op = _round_up(out_size, 8)
    f32 = jnp.float32

    p1 = jnp.zeros((hp, hp + 3), f32)                       # [w2^T | b2 | w1 | b1]
    p1 = p1.at[:hidden, :hidden].set(w2.T.astype(f32))
    p1 = p1.at[:hidden, hp].set(b2[0, :].astype(f32))
    p1 = p1.at[:hidden, hp + 1].set(w1[0, :].astype(f32))
    p1 = p1.at[:hidden, hp + 2].set(b1[0, :].astype(f32))

    p2 = jnp.zeros((op, hp + 1), f32)                       # [w3^T | b3]
    p2 = p2.at[:out_size, :hidden].set(w3.T.astype(f32))
    p2 = p2.at[:out_size, hp].set(b3[0, :].astype(f32))

    return {"p1": p1, "p2": p2, "hp": hp, "op": op,
            "hidden": hidden, "out_size": out_size}


# ------------------------------ Host wrapper ------------------------------ #
def epinet_forward(t, packed, *, batch_tile=None, max_batch_tile=8192,
                   feature_major_out=False):
    """t: (N, 1) float32. packed: output of pack_epinet_params.
    Returns (N, output_size) == sigmoid(MLP(t)); with feature_major_out=True
    returns the (output_size, N) kernel layout (skips the extra HBM transpose
    pass — preferred for large N when the consumer can take that layout).

    Note: a caller-supplied batch_tile is rounded up to a multiple of 128."""
    n = t.shape[0]
    hp, op = packed["hp"], packed["op"]
    out_size = packed["out_size"]
    p1, p2 = packed["p1"], packed["p2"]

    n128 = _round_up(max(n, 1), 128)
    cap = _round_up(max_batch_tile, 128)
    cores = _tensorcores_per_chip()

    if batch_tile is None:
        if cores >= 2 and n128 >= 256:
            # v7x: even number of grid steps (>=2) so both TCs get equal work.
            steps = max(2, pl.cdiv(n, cap))
            if steps % 2:
                steps += 1
            batch_tile = min(cap, _round_up(pl.cdiv(n, steps), 128))
        else:
            # v5e/v6e (1 TC): a single grid step for anything up to the cap.
            batch_tile = min(cap, n128)
    batch_tile = _round_up(batch_tile, 128)
    n_pad = _round_up(n, batch_tile)

    f32 = jnp.float32
    # Cheap host prep: (N,1) -> (1,N) is a free contiguous reshape, then pad.
    t_row = t.astype(f32).reshape(1, n)
    if n_pad != n:
        t_row = jnp.pad(t_row, ((0, 0), (0, n_pad - n)))

    grid = (n_pad // batch_tile,)
    kernel = functools.partial(_epinet_kernel, hp=hp)
    full = lambda a: pl.BlockSpec(a.shape, lambda i: (0, 0))   # whole small slab

    out_fm = pl.pallas_call(
        kernel,
        out_shape=jax.ShapeDtypeStruct((op, n_pad), f32),
        grid_spec=pltpu.PrefetchScalarGridSpec(
            num_scalar_prefetch=0,
            grid=grid,
            in_specs=[
                pl.BlockSpec((1, batch_tile), lambda i: (0, i)),  # t tile (lane-dense)
                full(p1),                                          # packed slab 1
                full(p2),                                          # packed slab 2
            ],
            out_specs=pl.BlockSpec((op, batch_tile), lambda i: (0, i)),
        ),
        compiler_params=pltpu.CompilerParams(
            dimension_semantics=("parallel",)),
    )(t_row, p1, p2)

    if feature_major_out:
        return out_fm[:out_size, :n]          # (O, N), no extra transpose pass
    return out_fm[:out_size, :n].T            # PyTorch (N, O) layout


# ---------------------- Deterministic parameter init ---------------------- #
def init_epinet_params(key, hidden_neurons=10, output_size=8):
    """Xavier-normal (gain = tanh gain = 5/3) weights, bias = 0.01,
    mirroring EpiNet.init_xavier (deterministic via PRNGKey)."""
    gain = 5.0 / 3.0  # nn.init.calculate_gain('tanh')

    def xavier_normal(k, fan_in, fan_out):
        std = gain * (2.0 / (fan_in + fan_out)) ** 0.5
        return std * jax.random.normal(k, (fan_in, fan_out), dtype=jnp.float32)

    k1, k2, k3 = jax.random.split(key, 3)
    return {
        "w1": xavier_normal(k1, 1, hidden_neurons),
        "b1": jnp.full((1, hidden_neurons), 0.01, dtype=jnp.float32),
        "w2": xavier_normal(k2, hidden_neurons, hidden_neurons),
        "b2": jnp.full((1, hidden_neurons), 0.01, dtype=jnp.float32),
        "w3": xavier_normal(k3, hidden_neurons, output_size),
        "b3": jnp.full((1, output_size), 0.01, dtype=jnp.float32),
    }


# ------------------------------- Reference -------------------------------- #
def epinet_reference(t, params):
    h = jnp.tanh(t @ params["w1"] + params["b1"])
    h = jnp.tanh(h @ params["w2"] + params["b2"])
    y = h @ params["w3"] + params["b3"]
    return jax.nn.sigmoid(y)


if __name__ == "__main__":
    hidden_neurons = 10
    output_size = 8
    batch = 300   # deliberately not a multiple of 128 → exercises batch padding

    key = jax.random.PRNGKey(0)
    pkey, tkey = jax.random.split(key)

    params = init_epinet_params(pkey, hidden_neurons, output_size)
    packed = pack_epinet_params(params)       # one-time host-side repack (cache this)
    t = jax.random.uniform(tkey, (batch, 1), dtype=jnp.float32)   # (N, 1) times

    out = epinet_forward(t, packed)
    out = jax.block_until_ready(out)

    ref = epinet_reference(t, params)
    assert out.shape == (batch, output_size)
    assert jnp.allclose(out, ref, atol=1e-5, rtol=1e-5), "Pallas kernel mismatch vs reference"

    # Also exercise the transpose-free output path once.
    out_fm = jax.block_until_ready(epinet_forward(t, packed, feature_major_out=True))
    assert out_fm.shape == (output_size, batch)
    assert jnp.allclose(out_fm.T, ref, atol=1e-5, rtol=1e-5)

    print("KERNEL_OK")
</pallas_src>

<mosaic_0001>
module attributes {stable_mosaic.version = 11 : i64} {
  func.func @_epinet_kernel(%arg0: i32, %arg1: memref<1x384xf32, #tpu.memory_space<vmem>>, %arg2: memref<16x19xf32, #tpu.memory_space<vmem>>, %arg3: memref<8x17xf32, #tpu.memory_space<vmem>>, %arg4: memref<8x384xf32, #tpu.memory_space<vmem>>) attributes {dimension_semantics = [#tpu.dimension_semantics<parallel>], iteration_bounds = array<i64: 1>, scalar_prefetch = 0 : i64, scratch_operands = 0 : i64, tpu.core_type = #tpu.core_type<tc>, window_params = [{transform_indices = @transform_0, window_bounds = array<i64: 1, 384>}, {pipeline_mode = #tpu.pipeline_mode<synchronous>, transform_indices = @transform_1, window_bounds = array<i64: 16, 19>}, {pipeline_mode = #tpu.pipeline_mode<synchronous>, transform_indices = @transform_2, window_bounds = array<i64: 8, 17>}, {transform_indices = @transform_3, window_bounds = array<i64: 8, 384>}]} {
    %c0 = arith.constant 0 : index
    %c0_0 = arith.constant 0 : index
    %0 = vector.load %arg1[%c0, %c0_0] : memref<1x384xf32, #tpu.memory_space<vmem>>, vector<1x384xf32>
    %c0_1 = arith.constant 0 : index
    %c0_2 = arith.constant 0 : index
    %1 = vector.load %arg2[%c0_1, %c0_2] : memref<16x19xf32, #tpu.memory_space<vmem>>, vector<16x16xf32>
    %c0_3 = arith.constant 0 : index
    %c16 = arith.constant 16 : index
    %2 = vector.load %arg2[%c0_3, %c16] : memref<16x19xf32, #tpu.memory_space<vmem>>, vector<16x1xf32>
    %c0_4 = arith.constant 0 : index
    %c17 = arith.constant 17 : index
    %3 = vector.load %arg2[%c0_4, %c17] : memref<16x19xf32, #tpu.memory_space<vmem>>, vector<16x1xf32>
    %c0_5 = arith.constant 0 : index
    %c18 = arith.constant 18 : index
    %4 = vector.load %arg2[%c0_5, %c18] : memref<16x19xf32, #tpu.memory_space<vmem>>, vector<16x1xf32>
    %c0_6 = arith.constant 0 : index
    %c0_7 = arith.constant 0 : index
    %5 = vector.load %arg3[%c0_6, %c0_7] : memref<8x17xf32, #tpu.memory_space<vmem>>, vector<8x16xf32>
    %c0_8 = arith.constant 0 : index
    %c16_9 = arith.constant 16 : index
    %6 = vector.load %arg3[%c0_8, %c16_9] : memref<8x17xf32, #tpu.memory_space<vmem>>, vector<8x1xf32>
    %7 = vector.broadcast %3 : vector<16x1xf32> to vector<16x384xf32>
    %8 = vector.broadcast %0 : vector<1x384xf32> to vector<16x384xf32>
    %9 = arith.mulf %7, %8 : vector<16x384xf32>
    %10 = vector.broadcast %4 : vector<16x1xf32> to vector<16x384xf32>
    %11 = arith.addf %9, %10 : vector<16x384xf32>
    %12 = math.tanh %11 : vector<16x384xf32>
    %cst = arith.constant dense<0.000000e+00> : vector<16x384xf32>
    %13 = tpu.matmul %1, %12, %cst {dimension_numbers = #tpu.dot_dimension_numbers<[1], [0], [0], [1], [0, 0, 1, 1], [], []>} : vector<16x16xf32>, vector<16x384xf32>, vector<16x384xf32> -> vector<16x384xf32>
    %14 = vector.broadcast %2 : vector<16x1xf32> to vector<16x384xf32>
    %15 = arith.addf %13, %14 : vector<16x384xf32>
    %16 = math.tanh %15 : vector<16x384xf32>
    %cst_10 = arith.constant dense<0.000000e+00> : vector<8x384xf32>
    %17 = tpu.matmul %5, %16, %cst_10 {dimension_numbers = #tpu.dot_dimension_numbers<[1], [0], [0], [1], [0, 0, 1, 1], [], []>} : vector<8x16xf32>, vector<16x384xf32>, vector<8x384xf32> -> vector<8x384xf32>
    %18 = vector.broadcast %6 : vector<8x1xf32> to vector<8x384xf32>
    %19 = arith.addf %17, %18 : vector<8x384xf32>
    %cst_11 = arith.constant 5.000000e-01 : f32
    %20 = vector.broadcast %cst_11 : f32 to vector<8x384xf32>
    %21 = arith.mulf %20, %19 : vector<8x384xf32>
    %22 = math.tanh %21 : vector<8x384xf32>
    %cst_12 = arith.constant 1.000000e+00 : f32
    %23 = vector.broadcast %cst_12 : f32 to vector<8x384xf32>
    %24 = arith.addf %22, %23 : vector<8x384xf32>
    %cst_13 = arith.constant 5.000000e-01 : f32
    %25 = vector.broadcast %cst_13 : f32 to vector<8x384xf32>
    %26 = arith.mulf %25, %24 : vector<8x384xf32>
    %c0_14 = arith.constant 0 : index
    %c0_15 = arith.constant 0 : index
    %27 = vector.load %arg4[%c0_14, %c0_15] : memref<8x384xf32, #tpu.memory_space<vmem>>, vector<8x384xf32>
    tpu.vector_store %arg4[%c0_14, %c0_15], %26 {strides = array<i32>} : memref<8x384xf32, #tpu.memory_space<vmem>>, vector<8x384xf32>,
    return
  }
  func.func @transform_0(%arg0: i32) -> (i32, i32) {
    %c0_i32 = arith.constant 0 : i32
    %c0_i32_0 = arith.constant 0 : i32
    return %c0_i32, %arg0 : i32, i32
  }
  func.func @transform_1(%arg0: i32) -> (i32, i32) {
    %c0_i32 = arith.constant 0 : i32
    %c0_i32_0 = arith.constant 0 : i32
    %c0_i32_1 = arith.constant 0 : i32
    return %c0_i32, %c0_i32_0 : i32, i32
  }
  func.func @transform_2(%arg0: i32) -> (i32, i32) {
    %c0_i32 = arith.constant 0 : i32
    %c0_i32_0 = arith.constant 0 : i32
    %c0_i32_1 = arith.constant 0 : i32
    return %c0_i32, %c0_i32_0 : i32, i32
  }
  func.func @transform_3(%arg0: i32) -> (i32, i32) {
    %c0_i32 = arith.constant 0 : i32
    %c0_i32_0 = arith.constant 0 : i32
    return %c0_i32, %arg0 : i32, i32
  }
}

</mosaic_0001>

<llo_original>
// kernel: tpu_custom_call.1
$region0: #{tpu_custom_call.1}
  #allocation0 [shape = 'u32[]', space=smem, size = 0x4, offset = 0x4, fixed_abs, tag = 'smem constant byte address 0x4 - core index']
  #allocation1 [shape = 'u32[144,128]{1,0:T(1,128)}', space=vmem, size = 0x12000, scoped, tag = 'internal scratch']
  %s0 = inlined_call_operand.hbm [shape: f32[1,384], index: 0, kind: input, shape index: {}]
  %s1 = inlined_call_operand.hbm [shape: f32[16,19], index: 1, kind: input, shape index: {}]
  %s2 = inlined_call_operand.hbm [shape: f32[8,17], index: 2, kind: input, shape index: {}]
  %s3 = inlined_call_operand.hbm [shape: f32[8,384], index: 3, kind: output, shape index: {}]
  %s4 = sld [smem:[#allocation0]]
  $region34: #{tpu_custom_call.1} parent=0
    _
  %s6 = ssub.s32 1, %s4
  %s7 = scalar_select 0, %s6, %s4
  $region1: #{tpu_custom_call.1} parent=0
    #allocation2 [shape = 'u8[1536]{0}', space=vmem, size = 0x800, scoped, tag = 'input window, operand 0, single buffered']
    #allocation3 [shape = 's32[1]{0}', space=sflag, size = 0x4, scoped, tag = 'scoped memory for tpu_custom_call.1']
    #allocation4 [shape = 's32[1]{0}', space=sflag, size = 0x4, scoped, tag = 'scoped memory for tpu_custom_call.1']
    #allocation5 [shape = 'u8[8192]{0}', space=vmem, size = 0x2000, scoped, tag = 'input window, operand 1, single buffered']
    #allocation6 [shape = 's32[1]{0}', space=sflag, size = 0x4, scoped, tag = 'scoped memory for tpu_custom_call.1']
    #allocation7 [shape = 'u8[4096]{0}', space=vmem, size = 0x1000, scoped, tag = 'input window, operand 2, single buffered']
    #allocation8 [shape = 'u8[12288]{0}', space=vmem, size = 0x3000, scoped, tag = 'output window, operand 0, single buffered']
    %8 = vsyncpa [#allocation3], 0
    %9 = vsyncpa [#allocation6], 0
    %10 = vsyncpa [#allocation4], 0
    // Predicated region
    $region2: #{tpu_custom_call.1} parent=1 // pred_check
      _
    $region3: #{tpu_custom_call.1} parent=1 // pred_check_branch
      %12 = sbr.rel (0) target = $region5
    $region4: #{tpu_custom_call.1} parent=1 // pred_region
      %s14 = ssub.s32 48, 48
      %15 = vsyncadd [#allocation3], %s14
      %s17 = sshll.u32 [#allocation2], 4
      %s18 = int_to_ptr.vmem [resolvable:$true] %s17
      %20 = dma.hbm_to_vmem [thread:$0]  %s0, 48, %s18, [#allocation3]
    $region5: #{tpu_custom_call.1} parent=1 // pred_fallthru
      _
    // Predicated region
    $region6: #{tpu_custom_call.1} parent=1 // pred_check
      _
    $region7: #{tpu_custom_call.1} parent=1 // pred_check_branch
      %22 = sbr.rel (0) target = $region9
    $region8: #{tpu_custom_call.1} parent=1 // pred_region
      %s24 = ssub.s32 256, 256
      %25 = vsyncadd [#allocation6], %s24
      %s26 = sshll.u32 [#allocation5], 4
      %s27 = int_to_ptr.vmem [resolvable:$true] %s26
      %32 = dma.hbm_to_vmem [thread:$0]  %s1, 256, %s27, [#allocation6], 128, 128, 8
    $region9: #{tpu_custom_call.1} parent=1 // pred_fallthru
      _
    // Predicated region
    $region10: #{tpu_custom_call.1} parent=1 // pred_check
      _
    $region11: #{tpu_custom_call.1} parent=1 // pred_check_branch
      %34 = sbr.rel (0) target = $region13
    $region12: #{tpu_custom_call.1} parent=1 // pred_region
      %s36 = ssub.s32 128, 128
      %37 = vsyncadd [#allocation6], %s36
      %s39 = sshll.u32 [#allocation7], 4
      %s40 = int_to_ptr.vmem [resolvable:$true] %s39
      %42 = dma.hbm_to_vmem [thread:$0]  %s2, 128, %s40, [#allocation6]
    $region13: #{tpu_custom_call.1} parent=1 // pred_fallthru
      _
    // Predicated region
    $region14: #{tpu_custom_call.1} parent=1 // pred_check
      _
    $region15: #{tpu_custom_call.1} parent=1 // pred_check_branch
      %44 = sbr.rel (0) target = $region17
    $region16: #{tpu_custom_call.1} parent=1 // pred_region
      %45 = dma.done [#allocation3], 48
    $region17: #{tpu_custom_call.1} parent=1 // pred_fallthru
      _
    // Predicated region
    $region18: #{tpu_custom_call.1} parent=1 // pred_check
      _
    $region19: #{tpu_custom_call.1} parent=1 // pred_check_branch
      %47 = sbr.rel (0) target = $region21
    $region20: #{tpu_custom_call.1} parent=1 // pred_region
      %48 = dma.done [#allocation6], 256
    $region21: #{tpu_custom_call.1} parent=1 // pred_fallthru
      _
    // Predicated region
    $region22: #{tpu_custom_call.1} parent=1 // pred_check
      _
    $region23: #{tpu_custom_call.1} parent=1 // pred_check_branch
      %50 = sbr.rel (0) target = $region25
    $region24: #{tpu_custom_call.1} parent=1 // pred_region
      %51 = dma.done [#allocation6], 128
    $region25: #{tpu_custom_call.1} parent=1 // pred_fallthru
      _
    %v52 = vld [vmem:[#allocation2] sm:$0x7]
    %v53 = vld [vmem:[#allocation5] sm:$0xff]
    %v54 = vld [vmem:[#allocation5 + $0x8] sm:$0xff]
    %v55 = vld [vmem:[#allocation7] sm:$0xff]
    %57 = vset.pattern.permute.xlu0 17
    %58 = vperm.xlu0 %57, %v53
    %v59 = vpop.permute.xlu0 %58
    %62 = vset.pattern.permute.xlu0 17
    %63 = vperm.xlu0 %62, %v54
    %v64 = vpop.permute.xlu0 %63
    %v67 = vlaneseq
    %v68 = vshrl.u32 %v67, 7
    %v69 = vsub.s32 0, %v68
    %v70 = vrot.slane %v52, %v69
    %v71 = vlaneseq
    %v72 = vshrl.u32 %v71, 7
    %v73 = vsub.s32 1, %v72
    %v74 = vrot.slane %v52, %v73
    %v75 = vlaneseq
    %v76 = vshrl.u32 %v75, 7
    %v77 = vsub.s32 2, %v76
    %v78 = vrot.slane %v52, %v77
    %v82 = vmul.f32 %v59, %v70
    %v83 = vmul.f32 %v59, %v74
    %v84 = vmul.f32 %v59, %v78
    %v85 = vmul.f32 %v64, %v70
    %v86 = vmul.f32 %v64, %v74
    %v87 = vmul.f32 %v64, %v78
    %88 = vset.pattern.permute.xlu0 18
    %89 = vperm.xlu0 %88, %v53
    %v90 = vpop.permute.xlu0 %89
    %92 = vset.pattern.permute.xlu0 18
    %93 = vperm.xlu0 %92, %v54
    %v94 = vpop.permute.xlu0 %93
    %v96 = vadd.f32 %v82, %v90
    %v97 = vadd.f32 %v83, %v90
    %v98 = vadd.f32 %v84, %v90
    %v99 = vadd.f32 %v85, %v94
    %v100 = vadd.f32 %v86, %v94
    %v101 = vadd.f32 %v87, %v94
    %v102 = vtanh.pop %v96
    %v103 = vtanh.pop %v97
    %v104 = vtanh.pop %v98
    %v105 = vtanh.pop %v99
    %v106 = vtanh.pop %v100
    %v107 = vtanh.pop %v101
    %108 = vset.pattern.permute.xlu0 16
    %109 = vperm.xlu0 %108, %v53
    %v110 = vpop.permute.xlu0 %109
    %112 = vset.pattern.permute.xlu0 16
    %113 = vperm.xlu0 %112, %v54
    %v114 = vpop.permute.xlu0 %113
    %vm116 = vcmask 130048
    %v117 = vsel %vm116, %v53, 0
    %v119 = vsel %vm116, %v54, 0
    %121 = vmatprep.subr.mxu0 %v103
    %122 = vmatpush1.msra.mxu0 %v102
    %123 = vmatprep.subr.mxu0 %v106
    %124 = vmatpush1.msra.mxu0 %v105
    %125 = vmatprep.subr.mxu0 0.0
    %126 = vmatpush1.msra.mxu0 0.0
    %127 = vmatprep.subr.mxu0 0.0
    %128 = vmatpush1.msra.mxu0 0.0
    %129 = vmatprep.subr.mxu0 0.0
    %130 = vmatpush1.msra.mxu0 0.0
    %131 = vmatprep.subr.mxu0 0.0
    %132 = vmatpush1.msra.mxu0 0.0
    %133 = vmatprep.subr.mxu0 0.0
    %134 = vmatpush1.msra.mxu0 0.0
    %135 = vmatprep.subr.mxu0 0.0
    %136 = vmatpush1.msra.mxu0 0.0
    %137 = vmatprep.subr.mxu0 0.0
    %138 = vmatpush1.msra.mxu0 0.0
    %139 = vmatprep.subr.mxu0 0.0
    %140 = vmatpush1.msra.mxu0 0.0
    %141 = vmatprep.subr.mxu0 0.0
    %142 = vmatpush1.msra.mxu0 0.0
    %143 = vmatprep.subr.mxu0 0.0
    %144 = vmatpush1.msra.mxu0 0.0
    %145 = vmatprep.subr.mxu0 0.0
    %146 = vmatpush1.msra.mxu0 0.0
    %147 = vmatprep.subr.mxu0 0.0
    %148 = vmatpush1.msra.mxu0 0.0
    %149 = vmatprep.subr.mxu0 0.0
    %150 = vmatpush1.msra.mxu0 0.0
    %151 = vmatprep.subr.mxu0 0.0
    %152 = vmatpush1.msra.mxu0 0.0
    %153 = vmatprep.subr.mxu0 0.0
    %154 = vmatpush1.msra.mxu0 0.0
    %155 = vmatprep.subr.mxu0 0.0
    %156 = vmatpush1.msra.mxu0 0.0
    %157 = vmatprep.subr.mxu0 0.0
    %158 = vmatpush1.msra.mxu0 0.0
    %159 = vmatprep.subr.mxu0 0.0
    %160 = vmatpush1.msra.mxu0 0.0
    %161 = vmatprep.subr.mxu0 0.0
    %162 = vmatpush1.msra.mxu0 0.0
    %163 = vmatprep.subr.mxu0 0.0
    %164 = vmatpush1.msra.mxu0 0.0
    %165 = vmatprep.subr.mxu0 0.0
    %166 = vmatpush1.msra.mxu0 0.0
    %167 = vmatprep.subr.mxu0 0.0
    %168 = vmatpush1.msra.mxu0 0.0
    %169 = vmatprep.subr.mxu0 0.0
    %170 = vmatpush1.msra.mxu0 0.0
    %171 = vmatprep.subr.mxu0 0.0
    %172 = vmatpush1.msra.mxu0 0.0
    %173 = vmatprep.subr.mxu0 0.0
    %174 = vmatpush1.msra.mxu0 0.0
    %175 = vmatprep.subr.mxu0 0.0
    %176 = vmatpush1.msra.mxu0 0.0
    %177 = vmatprep.subr.mxu0 0.0
    %178 = vmatpush1.msra.mxu0 0.0
    %179 = vmatprep.subr.mxu0 0.0
    %180 = vmatpush1.msra.mxu0 0.0
    %181 = vmatprep.subr.mxu0 0.0
    %182 = vmatpush1.msra.mxu0 0.0
    %183 = vmatprep.subr.mxu0 0.0
    %184 = vmatpush1.msra.mxu0 0.0
    %185 = vmatprep.mubr.f32.mxu0 0.0
    %186 = vmatmul.mubr.f32.gmra.mrb[0].mxu0 %v117
    %v187 = vpop.f32.mrb[0].mxu0
    %v188 = vadd.f32 %v110, %v187
    %v189 = vpop.f32.mrb[0].mxu0
    %v190 = vadd.f32 %v110, %v189
    %191 = vmatprep.mubr.f32.mxu0 0.0
    %192 = vmatmul.mubr.f32.gmra.mrb[0].mxu0 %v119
    %v193 = vpop.f32.mrb[0].mxu0
    %v194 = vadd.f32 %v114, %v193
    %v195 = vpop.f32.mrb[0].mxu0
    %v196 = vadd.f32 %v114, %v195
    %197 = vdwg.mxu0
    %198 = vmatprep.subr.mxu0 0.0
    %199 = vmatpush1.msra.mxu0 %v104
    %200 = vmatprep.subr.mxu0 0.0
    %201 = vmatpush1.msra.mxu0 %v107
    %202 = vmatprep.subr.mxu0 0.0
    %203 = vmatpush1.msra.mxu0 0.0
    %204 = vmatprep.subr.mxu0 0.0
    %205 = vmatpush1.msra.mxu0 0.0
    %206 = vmatprep.subr.mxu0 0.0
    %207 = vmatpush1.msra.mxu0 0.0
    %208 = vmatprep.subr.mxu0 0.0
    %209 = vmatpush1.msra.mxu0 0.0
    %210 = vmatprep.subr.mxu0 0.0
    %211 = vmatpush1.msra.mxu0 0.0
    %212 = vmatprep.subr.mxu0 0.0
    %213 = vmatpush1.msra.mxu0 0.0
    %214 = vmatprep.subr.mxu0 0.0
    %215 = vmatpush1.msra.mxu0 0.0
    %216 = vmatprep.subr.mxu0 0.0
    %217 = vmatpush1.msra.mxu0 0.0
    %218 = vmatprep.subr.mxu0 0.0
    %219 = vmatpush1.msra.mxu0 0.0
    %220 = vmatprep.subr.mxu0 0.0
    %221 = vmatpush1.msra.mxu0 0.0
    %222 = vmatprep.subr.mxu0 0.0
    %223 = vmatpush1.msra.mxu0 0.0
    %224 = vmatprep.subr.mxu0 0.0
    %225 = vmatpush1.msra.mxu0 0.0
    %226 = vmatprep.subr.mxu0 0.0
    %227 = vmatpush1.msra.mxu0 0.0
    %228 = vmatprep.subr.mxu0 0.0
    %229 = vmatpush1.msra.mxu0 0.0
    %230 = vmatprep.subr.mxu0 0.0
    %231 = vmatpush1.msra.mxu0 0.0
    %232 = vmatprep.subr.mxu0 0.0
    %233 = vmatpush1.msra.mxu0 0.0
    %234 = vmatprep.subr.mxu0 0.0
    %235 = vmatpush1.msra.mxu0 0.0
    %236 = vmatprep.subr.mxu0 0.0
    %237 = vmatpush1.msra.mxu0 0.0
    %238 = vmatprep.subr.mxu0 0.0
    %239 = vmatpush1.msra.mxu0 0.0
    %240 = vmatprep.subr.mxu0 0.0
    %241 = vmatpush1.msra.mxu0 0.0
    %242 = vmatprep.subr.mxu0 0.0
    %243 = vmatpush1.msra.mxu0 0.0
    %244 = vmatprep.subr.mxu0 0.0
    %245 = vmatpush1.msra.mxu0 0.0
    %246 = vmatprep.subr.mxu0 0.0
    %247 = vmatpush1.msra.mxu0 0.0
    %248 = vmatprep.subr.mxu0 0.0
    %249 = vmatpush1.msra.mxu0 0.0
    %250 = vmatprep.subr.mxu0 0.0
    %251 = vmatpush1.msra.mxu0 0.0
    %252 = vmatprep.subr.mxu0 0.0
    %253 = vmatpush1.msra.mxu0 0.0
    %254 = vmatprep.subr.mxu0 0.0
    %255 = vmatpush1.msra.mxu0 0.0
    %256 = vmatprep.subr.mxu0 0.0
    %257 = vmatpush1.msra.mxu0 0.0
    %258 = vmatprep.subr.mxu0 0.0
    %259 = vmatpush1.msra.mxu0 0.0
    %260 = vmatprep.subr.mxu0 0.0
    %261 = vmatpush1.msra.mxu0 0.0
    %262 = vmatprep.mubr.f32.mxu0 0.0
    %263 = vmatmul.mubr.f32.gmra.mrb[0].mxu0 %v117
    %v264 = vpop.f32.mrb[0].mxu0
    %v265 = vadd.f32 %v110, %v264
    %v266 = vpop.f32.mrb[0].mxu0
    %267 = vmatprep.mubr.f32.mxu0 0.0
    %268 = vmatmul.mubr.f32.gmra.mrb[0].mxu0 %v119
    %v269 = vpop.f32.mrb[0].mxu0
    %v270 = vadd.f32 %v114, %v269
    %v271 = vpop.f32.mrb[0].mxu0
    %272 = vdwg.mxu0
    %v273 = vtanh.pop %v188
    %v274 = vtanh.pop %v190
    %v275 = vtanh.pop %v265
    %v276 = vtanh.pop %v194
    %v277 = vtanh.pop %v196
    %v278 = vtanh.pop %v270
    %280 = vset.pattern.permute.xlu0 16
    %281 = vperm.xlu0 %280, %v55
    %v282 = vpop.permute.xlu0 %281
    %v284 = vsel %vm116, %v55, 0
    %286 = vmatprep.subr.mxu0 %v274
    %287 = vmatpush1.msra.mxu0 %v273
    %288 = vmatprep.subr.mxu0 %v277
    %289 = vmatpush1.msra.mxu0 %v276
    %290 = vmatprep.subr.mxu0 0.0
    %291 = vmatpush1.msra.mxu0 0.0
    %292 = vmatprep.subr.mxu0 0.0
    %293 = vmatpush1.msra.mxu0 0.0
    %294 = vmatprep.subr.mxu0 0.0
    %295 = vmatpush1.msra.mxu0 0.0
    %296 = vmatprep.subr.mxu0 0.0
    %297 = vmatpush1.msra.mxu0 0.0
    %298 = vmatprep.subr.mxu0 0.0
    %299 = vmatpush1.msra.mxu0 0.0
    %300 = vmatprep.subr.mxu0 0.0
    %301 = vmatpush1.msra.mxu0 0.0
    %302 = vmatprep.subr.mxu0 0.0
    %303 = vmatpush1.msra.mxu0 0.0
    %304 = vmatprep.subr.mxu0 0.0
    %305 = vmatpush1.msra.mxu0 0.0
    %306 = vmatprep.subr.mxu0 0.0
    %307 = vmatpush1.msra.mxu0 0.0
    %308 = vmatprep.subr.mxu0 0.0
    %309 = vmatpush1.msra.mxu0 0.0
    %310 = vmatprep.subr.mxu0 0.0
    %311 = vmatpush1.msra.mxu0 0.0
    %312 = vmatprep.subr.mxu0 0.0
    %313 = vmatpush1.msra.mxu0 0.0
    %314 = vmatprep.subr.mxu0 0.0
    %315 = vmatpush1.msra.mxu0 0.0
    %316 = vmatprep.subr.mxu0 0.0
    %317 = vmatpush1.msra.mxu0 0.0
    %318 = vmatprep.subr.mxu0 0.0
    %319 = vmatpush1.msra.mxu0 0.0
    %320 = vmatprep.subr.mxu0 0.0
    %321 = vmatpush1.msra.mxu0 0.0
    %322 = vmatprep.subr.mxu0 0.0
    %323 = vmatpush1.msra.mxu0 0.0
    %324 = vmatprep.subr.mxu0 0.0
    %325 = vmatpush1.msra.mxu0 0.0
    %326 = vmatprep.subr.mxu0 0.0
    %327 = vmatpush1.msra.mxu0 0.0
    %328 = vmatprep.subr.mxu0 0.0
    %329 = vmatpush1.msra.mxu0 0.0
    %330 = vmatprep.subr.mxu0 0.0
    %331 = vmatpush1.msra.mxu0 0.0
    %332 = vmatprep.subr.mxu0 0.0
    %333 = vmatpush1.msra.mxu0 0.0
    %334 = vmatprep.subr.mxu0 0.0
    %335 = vmatpush1.msra.mxu0 0.0
    %336 = vmatprep.subr.mxu0 0.0
    %337 = vmatpush1.msra.mxu0 0.0
    %338 = vmatprep.subr.mxu0 0.0
    %339 = vmatpush1.msra.mxu0 0.0
    %340 = vmatprep.subr.mxu0 0.0
    %341 = vmatpush1.msra.mxu0 0.0
    %342 = vmatprep.subr.mxu0 0.0
    %343 = vmatpush1.msra.mxu0 0.0
    %344 = vmatprep.subr.mxu0 0.0
    %345 = vmatpush1.msra.mxu0 0.0
    %346 = vmatprep.subr.mxu0 0.0
    %347 = vmatpush1.msra.mxu0 0.0
    %348 = vmatprep.subr.mxu0 0.0
    %349 = vmatpush1.msra.mxu0 0.0
    %350 = vmatprep.mubr.f32.mxu0 0.0
    %351 = vmatmul.mubr.f32.gmra.mrb[0].mxu0 %v284
    %v352 = vpop.f32.mrb[0].mxu0
    %v353 = vadd.f32 %v282, %v352
    %v354 = vpop.f32.mrb[0].mxu0
    %v355 = vadd.f32 %v282, %v354
    %356 = vdwg.mxu0
    %357 = vmatprep.subr.mxu0 0.0
    %358 = vmatpush1.msra.mxu0 %v275
    %359 = vmatprep.subr.mxu0 0.0
    %360 = vmatpush1.msra.mxu0 %v278
    %361 = vmatprep.subr.mxu0 0.0
    %362 = vmatpush1.msra.mxu0 0.0
    %363 = vmatprep.subr.mxu0 0.0
    %364 = vmatpush1.msra.mxu0 0.0
    %365 = vmatprep.subr.mxu0 0.0
    %366 = vmatpush1.msra.mxu0 0.0
    %367 = vmatprep.subr.mxu0 0.0
    %368 = vmatpush1.msra.mxu0 0.0
    %369 = vmatprep.subr.mxu0 0.0
    %370 = vmatpush1.msra.mxu0 0.0
    %371 = vmatprep.subr.mxu0 0.0
    %372 = vmatpush1.msra.mxu0 0.0
    %373 = vmatprep.subr.mxu0 0.0
    %374 = vmatpush1.msra.mxu0 0.0
    %375 = vmatprep.subr.mxu0 0.0
    %376 = vmatpush1.msra.mxu0 0.0
    %377 = vmatprep.subr.mxu0 0.0
    %378 = vmatpush1.msra.mxu0 0.0
    %379 = vmatprep.subr.mxu0 0.0
    %380 = vmatpush1.msra.mxu0 0.0
    %381 = vmatprep.subr.mxu0 0.0
    %382 = vmatpush1.msra.mxu0 0.0
    %383 = vmatprep.subr.mxu0 0.0
    %384 = vmatpush1.msra.mxu0 0.0
    %385 = vmatprep.subr.mxu0 0.0
    %386 = vmatpush1.msra.mxu0 0.0
    %387 = vmatprep.subr.mxu0 0.0
    %388 = vmatpush1.msra.mxu0 0.0
    %389 = vmatprep.subr.mxu0 0.0
    %390 = vmatpush1.msra.mxu0 0.0
    %391 = vmatprep.subr.mxu0 0.0
    %392 = vmatpush1.msra.mxu0 0.0
    %393 = vmatprep.subr.mxu0 0.0
    %394 = vmatpush1.msra.mxu0 0.0
    %395 = vmatprep.subr.mxu0 0.0
    %396 = vmatpush1.msra.mxu0 0.0
    %397 = vmatprep.subr.mxu0 0.0
    %398 = vmatpush1.msra.mxu0 0.0
    %399 = vmatprep.subr.mxu0 0.0
    %400 = vmatpush1.msra.mxu0 0.0
    %401 = vmatprep.subr.mxu0 0.0
    %402 = vmatpush1.msra.mxu0 0.0
    %403 = vmatprep.subr.mxu0 0.0
    %404 = vmatpush1.msra.mxu0 0.0
    %405 = vmatprep.subr.mxu0 0.0
    %406 = vmatpush1.msra.mxu0 0.0
    %407 = vmatprep.subr.mxu0 0.0
    %408 = vmatpush1.msra.mxu0 0.0
    %409 = vmatprep.subr.mxu0 0.0
    %410 = vmatpush1.msra.mxu0 0.0
    %411 = vmatprep.subr.mxu0 0.0
    %412 = vmatpush1.msra.mxu0 0.0
    %413 = vmatprep.subr.mxu0 0.0
    %414 = vmatpush1.msra.mxu0 0.0
    %415 = vmatprep.subr.mxu0 0.0
    %416 = vmatpush1.msra.mxu0 0.0
    %417 = vmatprep.subr.mxu0 0.0
    %418 = vmatpush1.msra.mxu0 0.0
    %419 = vmatprep.subr.mxu0 0.0
    %420 = vmatpush1.msra.mxu0 0.0
    %421 = vmatprep.mubr.f32.mxu0 0.0
    %422 = vmatmul.mubr.f32.gmra.mrb[0].mxu0 %v284
    %v423 = vpop.f32.mrb[0].mxu0
    %v424 = vadd.f32 %v282, %v423
    %v425 = vpop.f32.mrb[0].mxu0
    %426 = vdwg.mxu0
    %v427 = vmul.f32 %v353, 0.5
    %v428 = vmul.f32 %v355, 0.5
    %v429 = vmul.f32 %v424, 0.5
    %v430 = vtanh.pop %v427
    %v431 = vtanh.pop %v428
    %v432 = vtanh.pop %v429
    %v433 = vadd.f32 %v430, 1.0
    %v434 = vadd.f32 %v431, 1.0
    %v435 = vadd.f32 %v432, 1.0
    %v436 = vmul.f32 %v433, 0.5
    %v437 = vmul.f32 %v434, 0.5
    %v438 = vmul.f32 %v435, 0.5
    %439 = vst [vmem:[#allocation8] sm:$0xff] %v436
    %440 = vst [vmem:[#allocation8 + $0x8] sm:$0xff] %v437
    %441 = vst [vmem:[#allocation8 + $0x10] sm:$0xff] %v438
    // Predicated region
    $region26: #{tpu_custom_call.1} parent=1 // pred_check
      _
    $region27: #{tpu_custom_call.1} parent=1 // pred_check_branch
      %443 = sbr.rel (0) target = $region29
    $region28: #{tpu_custom_call.1} parent=1 // pred_region
      %s445 = ssub.s32 384, 384
      %446 = vsyncadd [#allocation4], %s445
      %s448 = sshll.u32 [#allocation8], 4
      %s449 = int_to_ptr.vmem [resolvable:$true] %s448
      %451 = dma.vmem_to_hbm [thread:$0]  %s449, 384, %s3, [#allocation4]
    $region29: #{tpu_custom_call.1} parent=1 // pred_fallthru
      _
    // Predicated region
    $region30: #{tpu_custom_call.1} parent=1 // pred_check
      _
    $region31: #{tpu_custom_call.1} parent=1 // pred_check_branch
      %453 = sbr.rel (0) target = $region33
    $region32: #{tpu_custom_call.1} parent=1 // pred_region
      %454 = dma.done [#allocation4], 384
    $region33: #{tpu_custom_call.1} parent=1 // pred_fallthru
      _
    %455 = vsyncpa [#allocation3], 1
    %456 = vsyncpa [#allocation6], 1
    %457 = vsyncpa [#allocation4], 1

</llo_original>
